<compile_context>
chip_gen: v7x
topology: tpu7x:2x2x1
jax: 0.10.0
libtpu: 0.0.40
codegen_flags: <defaults>
</compile_context>

<pallas_src>
import functools

import jax
import jax.numpy as jnp
from jax.experimental import pallas as pl
from jax.experimental.pallas import tpu as pltpu


def _ffn_kernel(x_ref, w1_ref, b1_ref, w2_ref, b2_ref, o_ref, acc_ref):
    # x_ref: (tm, Dp) | w1_ref: (Dp, tH) | b1_ref: (1, tH) f32
    # w2_ref: (tH, Dp) | b2_ref: (1, Dp) f32 | o_ref: (tm, Dp) | acc_ref: (tm, Dp) f32
    h_idx = pl.program_id(1)

    @pl.when(h_idx == 0)
    def _init():
        acc_ref[...] = jnp.zeros_like(acc_ref)

    # First linear, H-slice: (tm, Dp) @ (Dp, tH) -> f32 on the MXU.
    h = jnp.dot(x_ref[...], w1_ref[...], preferred_element_type=jnp.float32)
    h = h + b1_ref[...]

    # GELU (tanh approximation, matches the GPT-style GELU module), in f32.
    c = jnp.float32(0.7978845608028654)  # sqrt(2/pi)
    g = 0.5 * h * (1.0 + jnp.tanh(c * (h + 0.044715 * (h * h * h))))

    # Second linear partial product, accumulated in f32.
    acc_ref[...] += jnp.dot(g.astype(w2_ref.dtype), w2_ref[...],
                            preferred_element_type=jnp.float32)

    @pl.when(h_idx == pl.num_programs(1) - 1)
    def _finalize():
        o_ref[...] = (acc_ref[...] + b2_ref[...]).astype(o_ref.dtype)


def _round_up(a, b):
    return (a + b - 1) // b * b


def _pick_tiles(M, Dp, H, in_itemsize, out_itemsize, tm_max=512,
                vmem_budget=48 * 1024 * 1024):
    """Pick (row tile, hidden tile) so the double-buffered working set fits VMEM."""
    tm = min(tm_max, _round_up(M, 8))

    def usage(t_m, t_h):
        # double-buffered pipelined input blocks (x, w1, b1, w2, b2), double-buffered
        # output block, plus the f32 accumulator scratch.
        in_blocks = t_m * Dp + Dp * t_h + t_h + t_h * Dp + Dp
        return (2 * in_itemsize * in_blocks
                + 2 * out_itemsize * t_m * Dp
                + 4 * t_m * Dp)

    th = _round_up(H, 128)
    while th > 128 and usage(tm, th) > vmem_budget:
        th = max(128, _round_up(th // 2, 128))
    while tm > 8 and usage(tm, th) > vmem_budget:
        tm = max(8, _round_up(tm // 2, 8))
    return tm, th, usage(tm, th)


def _pad2d(a, rows, cols):
    """Zero-pad a 2-D array up to (rows, cols); no-op when already that shape."""
    pr, pc = rows - a.shape[0], cols - a.shape[1]
    if pr == 0 and pc == 0:
        return a
    return jnp.pad(a, ((0, pr), (0, pc)))


@functools.partial(jax.jit, static_argnames=("tm", "compute_dtype"))
def feed_forward(x, w1, b1, w2, b2, *, tm=512, compute_dtype=jnp.bfloat16):
    """x: (..., D). w1: (D, H), b1: (H,), w2: (H, D), b2: (D,). Returns x.shape."""
    orig_shape = x.shape
    orig_dtype = x.dtype
    D = orig_shape[-1]
    H = w1.shape[1]

    x2 = x.reshape(-1, D)
    M = x2.shape[0]

    in_itemsize = jnp.dtype(compute_dtype).itemsize
    out_itemsize = jnp.dtype(orig_dtype).itemsize
    Dp = _round_up(D, 128)                      # lane-dense output stores
    tm_eff, tH, vmem_est = _pick_tiles(M, Dp, H, in_itemsize, out_itemsize, tm_max=tm)
    Mp = _round_up(M, tm_eff)
    Hp = _round_up(H, tH)

    # Zero padding is mathematically inert: padded x columns / W1 rows contribute 0,
    # padded hidden columns hit zero W2 rows, padded output columns are sliced off.
    x_p = _pad2d(x2.astype(compute_dtype), Mp, Dp)
    w1_p = _pad2d(w1.astype(compute_dtype), Dp, Hp)
    b1_p = _pad2d(b1.astype(jnp.float32).reshape(1, H), 1, Hp)
    w2_p = _pad2d(w2.astype(compute_dtype), Hp, Dp)
    b2_p = _pad2d(b2.astype(jnp.float32).reshape(1, D), 1, Dp)

    grid = (Mp // tm_eff, Hp // tH)

    cost = pl.CostEstimate(
        flops=4 * Mp * Dp * Hp,                 # two matmuls, 2*M*D*H flops each
        transcendentals=Mp * Hp,                # one tanh per hidden element
        bytes_accessed=in_itemsize * (Mp * Dp + grid[0] * 2 * Dp * Hp)
        + 4 * (Hp + Dp)
        + out_itemsize * Mp * Dp,
    )

    out = pl.pallas_call(
        _ffn_kernel,
        out_shape=jax.ShapeDtypeStruct((Mp, Dp), orig_dtype),
        grid_spec=pltpu.PrefetchScalarGridSpec(
            num_scalar_prefetch=0,
            grid=grid,
            in_specs=[
                pl.BlockSpec((tm_eff, Dp), lambda i, h: (i, 0)),  # x row tile (resident over h)
                pl.BlockSpec((Dp, tH), lambda i, h: (0, h)),      # W1 H-slice
                pl.BlockSpec((1, tH), lambda i, h: (0, h)),       # b1 H-slice
                pl.BlockSpec((tH, Dp), lambda i, h: (h, 0)),      # W2 H-slice
                pl.BlockSpec((1, Dp), lambda i, h: (0, 0)),       # b2 (resident)
            ],
            out_specs=pl.BlockSpec((tm_eff, Dp), lambda i, h: (i, 0)),
            scratch_shapes=[pltpu.VMEM((tm_eff, Dp), jnp.float32)],
        ),
        compiler_params=pltpu.CompilerParams(
            dimension_semantics=("parallel", "arbitrary"),
            vmem_limit_bytes=int(min(max(2 * vmem_est, 32 << 20), 56 << 20)),
        ),
        cost_estimate=cost,
    )(x_p, w1_p, b1_p, w2_p, b2_p)

    if Mp == M and Dp == D:
        return out.reshape(orig_shape)
    return out[:M, :D].reshape(orig_shape)


def _reference(x, w1, b1, w2, b2):
    h = x @ w1 + b1
    c = 0.7978845608028654
    g = 0.5 * h * (1.0 + jnp.tanh(c * (h + 0.044715 * h ** 3)))
    return g @ w2 + b2


if __name__ == "__main__":
    # Small config: embedding_dimension=32, feed_forward_output_scale=4
    batch, seq, D, scale = 2, 8, 32, 4
    H = scale * D

    key = jax.random.PRNGKey(0)
    k_x, k_w1, k_b1, k_w2, k_b2 = jax.random.split(key, 5)

    x = jax.random.normal(k_x, (batch, seq, D), dtype=jnp.float32)
    # Deterministic synthetic parameter init (PyTorch-Linear-like uniform).
    lim1 = 1.0 / (D ** 0.5)
    lim2 = 1.0 / (H ** 0.5)
    w1 = jax.random.uniform(k_w1, (D, H), jnp.float32, -lim1, lim1)
    b1 = jax.random.uniform(k_b1, (H,), jnp.float32, -lim1, lim1)
    w2 = jax.random.uniform(k_w2, (H, D), jnp.float32, -lim2, lim2)
    b2 = jax.random.uniform(k_b2, (D,), jnp.float32, -lim2, lim2)

    ref = _reference(x.reshape(-1, D), w1, b1, w2, b2).reshape(batch, seq, D)

    # 1) Exact-dtype path (f32 operands) — tight tolerance.
    out_f32 = jax.block_until_ready(
        feed_forward(x, w1, b1, w2, b2, compute_dtype=jnp.float32))
    assert out_f32.shape == (batch, seq, D)
    assert jnp.allclose(out_f32, ref, atol=1e-5, rtol=1e-5), "f32 mismatch vs reference"

    # 2) Default fast path (bf16 matmul operands, f32 accumulation) — relaxed tolerance.
    out_bf16 = jax.block_until_ready(feed_forward(x, w1, b1, w2, b2))
    assert out_bf16.shape == (batch, seq, D)
    assert jnp.allclose(out_bf16, ref, atol=5e-2, rtol=5e-2), "bf16 mismatch vs reference"

    # 3) Ragged row count (M not a multiple of the row tile) exercises the padding path.
    x_odd = jax.random.normal(jax.random.PRNGKey(1), (2, 5, D), dtype=jnp.float32)
    ref_odd = _reference(x_odd.reshape(-1, D), w1, b1, w2, b2).reshape(2, 5, D)
    out_odd = jax.block_until_ready(
        feed_forward(x_odd, w1, b1, w2, b2, compute_dtype=jnp.float32))
    assert out_odd.shape == (2, 5, D)
    assert jnp.allclose(out_odd, ref_odd, atol=1e-5, rtol=1e-5), "ragged mismatch"

    print("KERNEL_OK")
</pallas_src>

<mosaic_0001>
module attributes {stable_mosaic.version = 11 : i64} {
  func.func @_ffn_kernel(%arg0: i32, %arg1: i32, %arg2: memref<16x128xf32, #tpu.memory_space<vmem>>, %arg3: memref<128x128xf32, #tpu.memory_space<vmem>>, %arg4: memref<1x128xf32, #tpu.memory_space<vmem>>, %arg5: memref<128x128xf32, #tpu.memory_space<vmem>>, %arg6: memref<1x128xf32, #tpu.memory_space<vmem>>, %arg7: memref<16x128xf32, #tpu.memory_space<vmem>>, %arg8: memref<16x128xf32, #tpu.memory_space<vmem>>) attributes {dimension_semantics = [#tpu.dimension_semantics<parallel>, #tpu.dimension_semantics<arbitrary>], iteration_bounds = array<i64: 1, 1>, scalar_prefetch = 0 : i64, scratch_operands = 1 : i64, tpu.core_type = #tpu.core_type<tc>, window_params = [{transform_indices = @transform_0, window_bounds = array<i64: 16, 128>}, {transform_indices = @transform_1, window_bounds = array<i64: 128, 128>}, {transform_indices = @transform_2, window_bounds = array<i64: 1, 128>}, {transform_indices = @transform_3, window_bounds = array<i64: 128, 128>}, {pipeline_mode = #tpu.pipeline_mode<synchronous>, transform_indices = @transform_4, window_bounds = array<i64: 1, 128>}, {transform_indices = @transform_5, window_bounds = array<i64: 16, 128>}]} {
    %c0_i32 = arith.constant 0 : i32
    %0 = arith.cmpi eq, %arg1, %c0_i32 : i32
    %1 = arith.extui %0 : i1 to i32
    %c0_i32_0 = arith.constant 0 : i32
    %2 = arith.cmpi ne, %1, %c0_i32_0 : i32
    scf.if %2 {
      %cst_19 = arith.constant 0.000000e+00 : f32
      %30 = vector.broadcast %cst_19 : f32 to vector<16x128xf32>
      %c0_20 = arith.constant 0 : index
      %c0_21 = arith.constant 0 : index
      %31 = vector.load %arg8[%c0_20, %c0_21] : memref<16x128xf32, #tpu.memory_space<vmem>>, vector<16x128xf32>
      tpu.vector_store %arg8[%c0_20, %c0_21], %30 {strides = array<i32>} : memref<16x128xf32, #tpu.memory_space<vmem>>, vector<16x128xf32>,
    } else {
    }
    %c0 = arith.constant 0 : index
    %c0_1 = arith.constant 0 : index
    %3 = vector.load %arg2[%c0, %c0_1] : memref<16x128xf32, #tpu.memory_space<vmem>>, vector<16x128xf32>
    %c0_2 = arith.constant 0 : index
    %c0_3 = arith.constant 0 : index
    %4 = vector.load %arg3[%c0_2, %c0_3] : memref<128x128xf32, #tpu.memory_space<vmem>>, vector<128x128xf32>
    %cst = arith.constant dense<0.000000e+00> : vector<16x128xf32>
    %5 = tpu.matmul %3, %4, %cst {dimension_numbers = #tpu.dot_dimension_numbers<[1], [0], [0], [1], [0, 0, 1, 1], [], []>} : vector<16x128xf32>, vector<128x128xf32>, vector<16x128xf32> -> vector<16x128xf32>
    %c0_4 = arith.constant 0 : index
    %c0_5 = arith.constant 0 : index
    %6 = vector.load %arg4[%c0_4, %c0_5] : memref<1x128xf32, #tpu.memory_space<vmem>>, vector<1x128xf32>
    %7 = vector.broadcast %6 : vector<1x128xf32> to vector<16x128xf32>
    %8 = arith.addf %5, %7 : vector<16x128xf32>
    %cst_6 = arith.constant 5.000000e-01 : f32
    %9 = vector.broadcast %cst_6 : f32 to vector<16x128xf32>
    %10 = arith.mulf %9, %8 : vector<16x128xf32>
    %11 = arith.mulf %8, %8 : vector<16x128xf32>
    %12 = arith.mulf %11, %8 : vector<16x128xf32>
    %cst_7 = arith.constant 4.471500e-02 : f32
    %13 = vector.broadcast %cst_7 : f32 to vector<16x128xf32>
    %14 = arith.mulf %13, %12 : vector<16x128xf32>
    %15 = arith.addf %8, %14 : vector<16x128xf32>
    %cst_8 = arith.constant 0.797884583 : f32
    %16 = vector.broadcast %cst_8 : f32 to vector<16x128xf32>
    %17 = arith.mulf %16, %15 : vector<16x128xf32>
    %18 = math.tanh %17 : vector<16x128xf32>
    %cst_9 = arith.constant 1.000000e+00 : f32
    %19 = vector.broadcast %cst_9 : f32 to vector<16x128xf32>
    %20 = arith.addf %19, %18 : vector<16x128xf32>
    %21 = arith.mulf %10, %20 : vector<16x128xf32>
    %c0_10 = arith.constant 0 : index
    %c0_11 = arith.constant 0 : index
    %22 = vector.load %arg8[%c0_10, %c0_11] : memref<16x128xf32, #tpu.memory_space<vmem>>, vector<16x128xf32>
    %c0_12 = arith.constant 0 : index
    %c0_13 = arith.constant 0 : index
    %23 = vector.load %arg5[%c0_12, %c0_13] : memref<128x128xf32, #tpu.memory_space<vmem>>, vector<128x128xf32>
    %cst_14 = arith.constant dense<0.000000e+00> : vector<16x128xf32>
    %24 = tpu.matmul %21, %23, %cst_14 {dimension_numbers = #tpu.dot_dimension_numbers<[1], [0], [0], [1], [0, 0, 1, 1], [], []>} : vector<16x128xf32>, vector<128x128xf32>, vector<16x128xf32> -> vector<16x128xf32>
    %25 = arith.addf %22, %24 : vector<16x128xf32>
    %c0_15 = arith.constant 0 : index
    %c0_16 = arith.constant 0 : index
    %26 = vector.load %arg8[%c0_15, %c0_16] : memref<16x128xf32, #tpu.memory_space<vmem>>, vector<16x128xf32>
    tpu.vector_store %arg8[%c0_15, %c0_16], %25 {strides = array<i32>} : memref<16x128xf32, #tpu.memory_space<vmem>>, vector<16x128xf32>,
    %c0_i32_17 = arith.constant 0 : i32
    %27 = arith.cmpi eq, %arg1, %c0_i32_17 : i32
    %28 = arith.extui %27 : i1 to i32
    %c0_i32_18 = arith.constant 0 : i32
    %29 = arith.cmpi ne, %28, %c0_i32_18 : i32
    scf.if %29 {
      %c0_19 = arith.constant 0 : index
      %c0_20 = arith.constant 0 : index
      %30 = vector.load %arg8[%c0_19, %c0_20] : memref<16x128xf32, #tpu.memory_space<vmem>>, vector<16x128xf32>
      %c0_21 = arith.constant 0 : index
      %c0_22 = arith.constant 0 : index
      %31 = vector.load %arg6[%c0_21, %c0_22] : memref<1x128xf32, #tpu.memory_space<vmem>>, vector<1x128xf32>
      %32 = vector.broadcast %31 : vector<1x128xf32> to vector<16x128xf32>
      %33 = arith.addf %30, %32 : vector<16x128xf32>
      %c0_23 = arith.constant 0 : index
      %c0_24 = arith.constant 0 : index
      %34 = vector.load %arg7[%c0_23, %c0_24] : memref<16x128xf32, #tpu.memory_space<vmem>>, vector<16x128xf32>
      tpu.vector_store %arg7[%c0_23, %c0_24], %33 {strides = array<i32>} : memref<16x128xf32, #tpu.memory_space<vmem>>, vector<16x128xf32>,
    } else {
    }
    return
  }
  func.func @transform_0(%arg0: i32, %arg1: i32) -> (i32, i32) {
    %c0_i32 = arith.constant 0 : i32
    %c0_i32_0 = arith.constant 0 : i32
    return %arg0, %c0_i32 : i32, i32
  }
  func.func @transform_1(%arg0: i32, %arg1: i32) -> (i32, i32) {
    %c0_i32 = arith.constant 0 : i32
    %c0_i32_0 = arith.constant 0 : i32
    return %c0_i32, %arg1 : i32, i32
  }
  func.func @transform_2(%arg0: i32, %arg1: i32) -> (i32, i32) {
    %c0_i32 = arith.constant 0 : i32
    %c0_i32_0 = arith.constant 0 : i32
    return %c0_i32, %arg1 : i32, i32
  }
  func.func @transform_3(%arg0: i32, %arg1: i32) -> (i32, i32) {
    %c0_i32 = arith.constant 0 : i32
    %c0_i32_0 = arith.constant 0 : i32
    return %arg1, %c0_i32 : i32, i32
  }
  func.func @transform_4(%arg0: i32, %arg1: i32) -> (i32, i32) {
    %c0_i32 = arith.constant 0 : i32
    %c0_i32_0 = arith.constant 0 : i32
    %c0_i32_1 = arith.constant 0 : i32
    return %c0_i32, %c0_i32_0 : i32, i32
  }
  func.func @transform_5(%arg0: i32, %arg1: i32) -> (i32, i32) {
    %c0_i32 = arith.constant 0 : i32
    %c0_i32_0 = arith.constant 0 : i32
    return %arg0, %c0_i32 : i32, i32
  }
}

</mosaic_0001>

<llo_original>
// kernel: feed_forward.1
$region0: #{feed_forward.1}
  #allocation0 [shape = 'u32[]', space=smem, size = 0x4, offset = 0x4, fixed_abs, tag = 'smem constant byte address 0x4 - core index']
  #allocation1 [shape = 'u32[144,128]{1,0:T(1,128)}', space=vmem, size = 0x12000, scoped, tag = 'internal scratch']
  #allocation2 [shape = 'f32[16,128]{1,0:T(8,128)}', space=vmem, size = 0x2000, scoped, tag = 'scratch operand']
  %s0 = inlined_call_operand.vmem [shape: f32[16,128], index: 0, kind: input, shape index: {}]
  %s1 = inlined_call_operand.vmem [shape: f32[128,128], index: 1, kind: input, shape index: {}]
  %s2 = inlined_call_operand.vmem [shape: f32[1,128], index: 2, kind: input, shape index: {}]
  %s3 = inlined_call_operand.vmem [shape: f32[128,128], index: 3, kind: input, shape index: {}]
  %s4 = inlined_call_operand.vmem [shape: f32[1,128], index: 4, kind: input, shape index: {}]
  %s5 = inlined_call_operand.vmem [shape: f32[16,128], index: 5, kind: output, shape index: {}]
  %s6 = sld [smem:[#allocation0]]
  $region38: #{feed_forward.1} parent=0
    _
  %s8 = ssub.s32 1, %s6
  %s9 = scalar_select 0, %s8, %s6
  // Predicated region
  $region2: #{feed_forward.1} parent=0 // pred_check
    _
  $region3: #{feed_forward.1} parent=0 // pred_check_branch
    %11 = sbr.rel (0) target = $region5
  $region4: #{feed_forward.1} parent=0 // pred_region
    _
  $region5: #{feed_forward.1} parent=0 // pred_fallthru
    _
  // Predicated region
  $region6: #{feed_forward.1} parent=0 // pred_check
    _
  $region7: #{feed_forward.1} parent=0 // pred_check_branch
    %13 = sbr.rel (0) target = $region9
  $region8: #{feed_forward.1} parent=0 // pred_region
    _
  $region9: #{feed_forward.1} parent=0 // pred_fallthru
    _
  // Predicated region
  $region10: #{feed_forward.1} parent=0 // pred_check
    _
  $region11: #{feed_forward.1} parent=0 // pred_check_branch
    %15 = sbr.rel (0) target = $region13
  $region12: #{feed_forward.1} parent=0 // pred_region
    _
  $region13: #{feed_forward.1} parent=0 // pred_fallthru
    _
  // Predicated region
  $region14: #{feed_forward.1} parent=0 // pred_check
    _
  $region15: #{feed_forward.1} parent=0 // pred_check_branch
    %17 = sbr.rel (0) target = $region17
  $region16: #{feed_forward.1} parent=0 // pred_region
    _
  $region17: #{feed_forward.1} parent=0 // pred_fallthru
    _
  // Predicated region
  $region18: #{feed_forward.1} parent=0 // pred_check
    _
  $region19: #{feed_forward.1} parent=0 // pred_check_branch
    %19 = sbr.rel (0) target = $region21
  $region20: #{feed_forward.1} parent=0 // pred_region
    _
  $region21: #{feed_forward.1} parent=0 // pred_fallthru
    _
  %p20 = scmp.eq.s32.totalorder 0, 0
  // Predicated region
  $region22: #{feed_forward.1} parent=0 // pred_check
    %p21 = pneg %p20
  $region23: #{feed_forward.1} parent=0 // pred_check_branch
    %23 = sbr.rel (%p21) target = $region25
  $region24: #{feed_forward.1} parent=0 // pred_region
    %24 = vst [vmem:[#allocation2] sm:$0xff] 0.0
    %25 = vst [vmem:[#allocation2 + $0x8] sm:$0xff] 0.0
  $region25: #{feed_forward.1} parent=0 // pred_fallthru
    _
  %v26 = vld [vmem:[%s0] sm:$0xff]
  %v27 = vld [vmem:[%s0 + $0x8] sm:$0xff]
  %v28 = vld [vmem:[%s1] sm:$0xff]
  %v29 = vld [vmem:[%s1 + $0x8] sm:$0xff]
  %v30 = vld [vmem:[%s1 + $0x10] sm:$0xff]
  %v31 = vld [vmem:[%s1 + $0x18] sm:$0xff]
  %v32 = vld [vmem:[%s1 + $0x20] sm:$0xff]
  %v33 = vld [vmem:[%s1 + $0x28] sm:$0xff]
  %v34 = vld [vmem:[%s1 + $0x30] sm:$0xff]
  %v35 = vld [vmem:[%s1 + $0x38] sm:$0xff]
  %v36 = vld [vmem:[%s1 + $0x40] sm:$0xff]
  %v37 = vld [vmem:[%s1 + $0x48] sm:$0xff]
  %v38 = vld [vmem:[%s1 + $0x50] sm:$0xff]
  %v39 = vld [vmem:[%s1 + $0x58] sm:$0xff]
  %v40 = vld [vmem:[%s1 + $0x60] sm:$0xff]
  %v41 = vld [vmem:[%s1 + $0x68] sm:$0xff]
  %v42 = vld [vmem:[%s1 + $0x70] sm:$0xff]
  %v43 = vld [vmem:[%s1 + $0x78] sm:$0xff]
  %v44 = vld [vmem:[%s2] sm:$0x1]
  %v46 = vlaneseq
  %v47 = vshrl.u32 %v46, 7
  %v48 = vsub.s32 0, %v47
  %v49 = vrot.slane %v44, %v48
  %51 = vmatprep.subr.mxu0 0.0
  %52 = vmatpush1.msra.mxu0 %v28
  %53 = vmatprep.subr.mxu0 0.0
  %54 = vmatpush1.msra.mxu0 %v29
  %55 = vmatprep.subr.mxu0 0.0
  %56 = vmatpush1.msra.mxu0 %v30
  %57 = vmatprep.subr.mxu0 0.0
  %58 = vmatpush1.msra.mxu0 %v31
  %59 = vmatprep.subr.mxu0 0.0
  %60 = vmatpush1.msra.mxu0 %v32
  %61 = vmatprep.subr.mxu0 0.0
  %62 = vmatpush1.msra.mxu0 %v33
  %63 = vmatprep.subr.mxu0 0.0
  %64 = vmatpush1.msra.mxu0 %v34
  %65 = vmatprep.subr.mxu0 0.0
  %66 = vmatpush1.msra.mxu0 %v35
  %67 = vmatprep.subr.mxu0 0.0
  %68 = vmatpush1.msra.mxu0 %v36
  %69 = vmatprep.subr.mxu0 0.0
  %70 = vmatpush1.msra.mxu0 %v37
  %71 = vmatprep.subr.mxu0 0.0
  %72 = vmatpush1.msra.mxu0 %v38
  %73 = vmatprep.subr.mxu0 0.0
  %74 = vmatpush1.msra.mxu0 %v39
  %75 = vmatprep.subr.mxu0 0.0
  %76 = vmatpush1.msra.mxu0 %v40
  %77 = vmatprep.subr.mxu0 0.0
  %78 = vmatpush1.msra.mxu0 %v41
  %79 = vmatprep.subr.mxu0 0.0
  %80 = vmatpush1.msra.mxu0 %v42
  %81 = vmatprep.subr.mxu0 0.0
  %82 = vmatpush1.msra.mxu0 %v43
  %83 = vmatprep.subr.mxu0 0.0
  %84 = vmatpush1.msra.mxu0 0.0
  %85 = vmatprep.subr.mxu0 0.0
  %86 = vmatpush1.msra.mxu0 0.0
  %87 = vmatprep.subr.mxu0 0.0
  %88 = vmatpush1.msra.mxu0 0.0
  %89 = vmatprep.subr.mxu0 0.0
  %90 = vmatpush1.msra.mxu0 0.0
  %91 = vmatprep.subr.mxu0 0.0
  %92 = vmatpush1.msra.mxu0 0.0
  %93 = vmatprep.subr.mxu0 0.0
  %94 = vmatpush1.msra.mxu0 0.0
  %95 = vmatprep.subr.mxu0 0.0
  %96 = vmatpush1.msra.mxu0 0.0
  %97 = vmatprep.subr.mxu0 0.0
  %98 = vmatpush1.msra.mxu0 0.0
  %99 = vmatprep.subr.mxu0 0.0
  %100 = vmatpush1.msra.mxu0 0.0
  %101 = vmatprep.subr.mxu0 0.0
  %102 = vmatpush1.msra.mxu0 0.0
  %103 = vmatprep.subr.mxu0 0.0
  %104 = vmatpush1.msra.mxu0 0.0
  %105 = vmatprep.subr.mxu0 0.0
  %106 = vmatpush1.msra.mxu0 0.0
  %107 = vmatprep.subr.mxu0 0.0
  %108 = vmatpush1.msra.mxu0 0.0
  %109 = vmatprep.subr.mxu0 0.0
  %110 = vmatpush1.msra.mxu0 0.0
  %111 = vmatprep.subr.mxu0 0.0
  %112 = vmatpush1.msra.mxu0 0.0
  %113 = vmatprep.subr.mxu0 0.0
  %114 = vmatpush1.msra.mxu0 0.0
  %115 = vmatprep.mubr.f32.mxu0 0.0
  %116 = vmatmul.mubr.f32.gmra.mrb[0].mxu0 %v26
  %v117 = vpop.f32.mrb[0].mxu0
  %v118 = vadd.f32 %v49, %v117
  %v119 = vpop.f32.mrb[0].mxu0
  %120 = vmatprep.mubr.f32.mxu0 0.0
  %121 = vmatmul.mubr.f32.gmra.mrb[0].mxu0 %v27
  %v122 = vpop.f32.mrb[0].mxu0
  %v123 = vadd.f32 %v49, %v122
  %v124 = vpop.f32.mrb[0].mxu0
  %125 = vdwg.mxu0
  %v126 = vmul.f32 %v118, 0.5
  %v127 = vmul.f32 %v123, 0.5
  %v128 = vmul.f32 %v118, %v118
  %v129 = vmul.f32 %v123, %v123
  %v130 = vmul.f32 %v128, %v118
  %v131 = vmul.f32 %v129, %v123
  %v132 = vmul.f32 %v130, 0.044715
  %v133 = vmul.f32 %v131, 0.044715
  %v134 = vadd.f32 %v118, %v132
  %v135 = vadd.f32 %v123, %v133
  %v136 = vmul.f32 %v134, 0.7978846
  %v137 = vmul.f32 %v135, 0.7978846
  %v138 = vtanh.pop %v136
  %v139 = vtanh.pop %v137
  %v140 = vadd.f32 %v138, 1.0
  %v141 = vadd.f32 %v139, 1.0
  %v142 = vmul.f32 %v126, %v140
  %v143 = vmul.f32 %v127, %v141
  %v144 = vld [vmem:[#allocation2] sm:$0xff]
  %v145 = vld [vmem:[#allocation2 + $0x8] sm:$0xff]
  %v146 = vld [vmem:[%s3] sm:$0xff]
  %v147 = vld [vmem:[%s3 + $0x8] sm:$0xff]
  %v148 = vld [vmem:[%s3 + $0x10] sm:$0xff]
  %v149 = vld [vmem:[%s3 + $0x18] sm:$0xff]
  %v150 = vld [vmem:[%s3 + $0x20] sm:$0xff]
  %v151 = vld [vmem:[%s3 + $0x28] sm:$0xff]
  %v152 = vld [vmem:[%s3 + $0x30] sm:$0xff]
  %v153 = vld [vmem:[%s3 + $0x38] sm:$0xff]
  %v154 = vld [vmem:[%s3 + $0x40] sm:$0xff]
  %v155 = vld [vmem:[%s3 + $0x48] sm:$0xff]
  %v156 = vld [vmem:[%s3 + $0x50] sm:$0xff]
  %v157 = vld [vmem:[%s3 + $0x58] sm:$0xff]
  %v158 = vld [vmem:[%s3 + $0x60] sm:$0xff]
  %v159 = vld [vmem:[%s3 + $0x68] sm:$0xff]
  %v160 = vld [vmem:[%s3 + $0x70] sm:$0xff]
  %v161 = vld [vmem:[%s3 + $0x78] sm:$0xff]
  %162 = vmatprep.subr.mxu0 0.0
  %163 = vmatpush1.msra.mxu0 %v146
  %164 = vmatprep.subr.mxu0 0.0
  %165 = vmatpush1.msra.mxu0 %v147
  %166 = vmatprep.subr.mxu0 0.0
  %167 = vmatpush1.msra.mxu0 %v148
  %168 = vmatprep.subr.mxu0 0.0
  %169 = vmatpush1.msra.mxu0 %v149
  %170 = vmatprep.subr.mxu0 0.0
  %171 = vmatpush1.msra.mxu0 %v150
  %172 = vmatprep.subr.mxu0 0.0
  %173 = vmatpush1.msra.mxu0 %v151
  %174 = vmatprep.subr.mxu0 0.0
  %175 = vmatpush1.msra.mxu0 %v152
  %176 = vmatprep.subr.mxu0 0.0
  %177 = vmatpush1.msra.mxu0 %v153
  %178 = vmatprep.subr.mxu0 0.0
  %179 = vmatpush1.msra.mxu0 %v154
  %180 = vmatprep.subr.mxu0 0.0
  %181 = vmatpush1.msra.mxu0 %v155
  %182 = vmatprep.subr.mxu0 0.0
  %183 = vmatpush1.msra.mxu0 %v156
  %184 = vmatprep.subr.mxu0 0.0
  %185 = vmatpush1.msra.mxu0 %v157
  %186 = vmatprep.subr.mxu0 0.0
  %187 = vmatpush1.msra.mxu0 %v158
  %188 = vmatprep.subr.mxu0 0.0
  %189 = vmatpush1.msra.mxu0 %v159
  %190 = vmatprep.subr.mxu0 0.0
  %191 = vmatpush1.msra.mxu0 %v160
  %192 = vmatprep.subr.mxu0 0.0
  %193 = vmatpush1.msra.mxu0 %v161
  %194 = vmatprep.subr.mxu0 0.0
  %195 = vmatpush1.msra.mxu0 0.0
  %196 = vmatprep.subr.mxu0 0.0
  %197 = vmatpush1.msra.mxu0 0.0
  %198 = vmatprep.subr.mxu0 0.0
  %199 = vmatpush1.msra.mxu0 0.0
  %200 = vmatprep.subr.mxu0 0.0
  %201 = vmatpush1.msra.mxu0 0.0
  %202 = vmatprep.subr.mxu0 0.0
  %203 = vmatpush1.msra.mxu0 0.0
  %204 = vmatprep.subr.mxu0 0.0
  %205 = vmatpush1.msra.mxu0 0.0
  %206 = vmatprep.subr.mxu0 0.0
  %207 = vmatpush1.msra.mxu0 0.0
  %208 = vmatprep.subr.mxu0 0.0
  %209 = vmatpush1.msra.mxu0 0.0
  %210 = vmatprep.subr.mxu0 0.0
  %211 = vmatpush1.msra.mxu0 0.0
  %212 = vmatprep.subr.mxu0 0.0
  %213 = vmatpush1.msra.mxu0 0.0
  %214 = vmatprep.subr.mxu0 0.0
  %215 = vmatpush1.msra.mxu0 0.0
  %216 = vmatprep.subr.mxu0 0.0
  %217 = vmatpush1.msra.mxu0 0.0
  %218 = vmatprep.subr.mxu0 0.0
  %219 = vmatpush1.msra.mxu0 0.0
  %220 = vmatprep.subr.mxu0 0.0
  %221 = vmatpush1.msra.mxu0 0.0
  %222 = vmatprep.subr.mxu0 0.0
  %223 = vmatpush1.msra.mxu0 0.0
  %224 = vmatprep.subr.mxu0 0.0
  %225 = vmatpush1.msra.mxu0 0.0
  %226 = vmatprep.mubr.f32.mxu0 0.0
  %227 = vmatmul.mubr.f32.gmra.mrb[0].mxu0 %v142
  %v228 = vpop.f32.mrb[0].mxu0
  %v229 = vadd.f32 0.0, %v228
  %v230 = vpop.f32.mrb[0].mxu0
  %231 = vmatprep.mubr.f32.mxu0 0.0
  %232 = vmatmul.mubr.f32.gmra.mrb[0].mxu0 %v143
  %v233 = vpop.f32.mrb[0].mxu0
  %v234 = vadd.f32 0.0, %v233
  %v235 = vpop.f32.mrb[0].mxu0
  %236 = vdwg.mxu0
  %v237 = vadd.f32 %v144, %v229
  %v238 = vadd.f32 %v145, %v234
  %239 = vst [vmem:[#allocation2] sm:$0xff] %v237
  %240 = vst [vmem:[#allocation2 + $0x8] sm:$0xff] %v238
  // Predicated region
  $region26: #{feed_forward.1} parent=0 // pred_check
    %p241 = pneg %p20
  $region27: #{feed_forward.1} parent=0 // pred_check_branch
    %243 = sbr.rel (%p241) target = $region29
  $region28: #{feed_forward.1} parent=0 // pred_region
    %v244 = vld [vmem:[#allocation2] sm:$0xff]
    %v245 = vld [vmem:[#allocation2 + $0x8] sm:$0xff]
    %v246 = vld [vmem:[%s4] sm:$0x1]
    %v248 = vlaneseq
    %v249 = vshrl.u32 %v248, 7
    %v250 = vsub.s32 0, %v249
    %v251 = vrot.slane %v246, %v250
    %v253 = vadd.f32 %v244, %v251
    %v254 = vadd.f32 %v245, %v251
    %255 = vst [vmem:[%s5] sm:$0xff] %v253
    %256 = vst [vmem:[%s5 + $0x8] sm:$0xff] %v254
  $region29: #{feed_forward.1} parent=0 // pred_fallthru
    _
  // Predicated region
  $region30: #{feed_forward.1} parent=0 // pred_check
    _
  $region31: #{feed_forward.1} parent=0 // pred_check_branch
    %258 = sbr.rel (0) target = $region33
  $region32: #{feed_forward.1} parent=0 // pred_region
    _
  $region33: #{feed_forward.1} parent=0 // pred_fallthru
    _
  // Predicated region
  $region34: #{feed_forward.1} parent=0 // pred_check
    _
  $region35: #{feed_forward.1} parent=0 // pred_check_branch
    %260 = sbr.rel (0) target = $region37
  $region36: #{feed_forward.1} parent=0 // pred_region
    _
  $region37: #{feed_forward.1} parent=0 // pred_fallthru
    _

</llo_original>
